<compile_context>
chip_gen: v7x
topology: tpu7x:2x2x1
jax: 0.10.0
libtpu: 0.0.40
codegen_flags: <defaults>
</compile_context>

<pallas_src>
import functools

import jax
import jax.numpy as jnp
from jax.experimental import pallas as pl
from jax.experimental.pallas import tpu as pltpu

LANES = 128
SUBLANES = 8
ROW_ALIGN = 32                    # covers f32(8) / bf16(16) / int8-fp8(32) packing
TARGET_BLOCK_BYTES = 2 << 20      # ~2 MiB per input per grid step
MAX_COLS = 1 << 15                # cap on the collapsed trailing-dim width
VMEM_LIMIT_BYTES = 32 * 1024 * 1024


def _num_tensorcores():
    """Best-effort TensorCore count per device; defaults to 1 (v5e/v6e)."""
    try:
        info = pltpu.get_tpu_info()
        for name in ("num_cores", "num_tensorcores", "tensorcore_count",
                     "cores_per_chip"):
            v = getattr(info, name, None)
            if isinstance(v, int) and 1 <= v <= 8:
                return min(v, 2)
    except Exception:
        pass
    try:
        kind = jax.devices()[0].device_kind.lower()
        # Chips that expose 2 TensorCores behind one device (megacore).
        if any(tag in kind for tag in ("v4", "v5p", "v7")):
            return 2
    except Exception:
        pass
    return 1


def _free_2d_view(shape, n):
    """Pick (rows, cols) with rows*cols == n reachable by a copy-free reshape."""
    if n % LANES == 0:
        return n // LANES, LANES
    cols = 1
    for d in reversed(shape):
        if cols >= LANES:
            break
        if cols > 1 and cols * int(d) > MAX_COLS:
            break
        cols *= int(d)
    if cols > MAX_COLS:
        return None
    return n // cols, cols


def _dice_partial_kernel(pred_ref, target_ref, out_ref,
                         acc_pt, acc_p, acc_t,
                         *, block_rows, cols, acc_rows, inner_blocks,
                         valid_rows, edge_handling):
    k = pl.program_id(1)

    @pl.when(k == 0)
    def _init():
        acc_pt[...] = jnp.zeros_like(acc_pt)
        acc_p[...] = jnp.zeros_like(acc_p)
        acc_t[...] = jnp.zeros_like(acc_t)

    # Stream native dtype from HBM; cast to f32 on the VPU.
    p = pred_ref[...].astype(jnp.float32)
    t = target_ref[...].astype(jnp.float32)

    def _accumulate(pv, tv):
        if acc_rows == SUBLANES:
            # Fold (block_rows, cols) -> (folds, 8, cols); sum over the leading
            # axis is pure vreg-wise VPU adds (no per-step XLU reduction).
            folds = block_rows // SUBLANES
            acc_pt[...] += jnp.sum((pv * tv).reshape(folds, SUBLANES, cols), axis=0)
            acc_p[...] += jnp.sum(pv.reshape(folds, SUBLANES, cols), axis=0)
            acc_t[...] += jnp.sum(tv.reshape(folds, SUBLANES, cols), axis=0)
        else:
            # Tiny single-block case whose row count is not a multiple of 8.
            acc_pt[...] += jnp.sum(pv * tv, axis=0, keepdims=True)
            acc_p[...] += jnp.sum(pv, axis=0, keepdims=True)
            acc_t[...] += jnp.sum(tv, axis=0, keepdims=True)

    if not edge_handling:
        _accumulate(p, t)
    else:
        # Only the ragged last block (or a clamped duplicated block) pays the
        # mask cost; full in-range blocks take the mask-free fast path.
        j = pl.program_id(0)
        b = j * inner_blocks + k                    # unclamped global block id
        row_start = b * block_rows
        is_edge = row_start + block_rows > valid_rows

        @pl.when(jnp.logical_not(is_edge))
        def _fast():
            _accumulate(p, t)

        @pl.when(is_edge)
        def _masked():
            row_ids = row_start + jax.lax.broadcasted_iota(
                jnp.int32, (block_rows, cols), 0)
            valid = row_ids < valid_rows
            zero = jnp.zeros_like(p)
            _accumulate(jnp.where(valid, p, zero), jnp.where(valid, t, zero))

    @pl.when(k == pl.num_programs(1) - 1)
    def _finalize():
        out_ref[0, 0, :, :] = acc_pt[...]
        out_ref[0, 1, :, :] = acc_p[...]
        out_ref[0, 2, :, :] = acc_t[...]


def dice_loss(pred, target, smooth=1.0):
    """Pallas TPU implementation of DiceLoss.forward (returns scalar f32)."""
    assert pred.shape == target.shape, "pred/target must have identical shapes"

    n = int(pred.size)
    if n == 0:
        return jnp.float32(0.0)

    # ---- copy-free 2-D view (no full-array jnp.pad) --------------------------
    view = _free_2d_view(pred.shape, n)
    if view is None:
        # Rare corner case (e.g. huge ragged 1-D input): minimal zero pad
        # (< 128 elements, but this path does materialize a copy).
        n_pad = pl.cdiv(n, LANES) * LANES
        rows, cols = n_pad // LANES, LANES
        p2d = jnp.pad(pred.reshape(-1), (0, n_pad - n)).reshape(rows, cols)
        t2d = jnp.pad(target.reshape(-1), (0, n_pad - n)).reshape(rows, cols)
    else:
        rows, cols = view
        p2d = pred.reshape(rows, cols)        # free reshape of contiguous data
        t2d = target.reshape(rows, cols)

    # ---- block / grid selection ----------------------------------------------
    itemsize = max(jnp.dtype(p2d.dtype).itemsize, jnp.dtype(t2d.dtype).itemsize)
    cols_padded = pl.cdiv(cols, LANES) * LANES
    bytes_per_row = cols_padded * itemsize
    block_rows = max(ROW_ALIGN,
                     (TARGET_BLOCK_BYTES // bytes_per_row) // ROW_ALIGN * ROW_ALIGN)
    if block_rows >= rows:
        block_rows = rows                     # single full-extent block
    num_blocks = pl.cdiv(rows, block_rows)

    cores = _num_tensorcores()
    num_shards = min(cores, num_blocks)
    if num_shards > 1:
        inner_blocks = pl.cdiv(num_blocks, num_shards)
        # Rebalance block_rows so the (shards x inner_blocks) decomposition
        # covers rows without a clamped duplicated block when possible.
        nb_target = num_shards * inner_blocks
        br = pl.cdiv(pl.cdiv(rows, nb_target), ROW_ALIGN) * ROW_ALIGN
        if 0 < br <= block_rows:
            block_rows = br
            num_blocks = pl.cdiv(rows, block_rows)
            inner_blocks = pl.cdiv(num_blocks, num_shards)
    else:
        inner_blocks = num_blocks

    acc_rows = SUBLANES if block_rows % SUBLANES == 0 else 1
    need_clamp = (num_shards * inner_blocks) > num_blocks
    edge_handling = (num_shards * inner_blocks * block_rows) != rows

    if need_clamp:
        def in_map(j, k):
            return (jnp.minimum(j * inner_blocks + k, num_blocks - 1), 0)
    else:
        def in_map(j, k):
            return (j * inner_blocks + k, 0)

    in_spec = pl.BlockSpec((block_rows, cols), in_map)
    out_spec = pl.BlockSpec((1, 3, acc_rows, cols), lambda j, k: (j, 0, 0, 0))

    if num_shards > 1:
        # Real cross-TensorCore split (v4/v5p/v7x); "parallel" alone does not
        # change codegen, per the perf review.
        dim_sems = (getattr(pltpu, "CORE_PARALLEL", "parallel"), "arbitrary")
    else:
        dim_sems = ("arbitrary", "arbitrary")

    bytes_in = (int(p2d.size) * p2d.dtype.itemsize
                + int(t2d.size) * t2d.dtype.itemsize)

    partials = pl.pallas_call(
        functools.partial(
            _dice_partial_kernel,
            block_rows=block_rows,
            cols=cols,
            acc_rows=acc_rows,
            inner_blocks=inner_blocks,
            valid_rows=rows,
            edge_handling=edge_handling,
        ),
        out_shape=jax.ShapeDtypeStruct((num_shards, 3, acc_rows, cols),
                                       jnp.float32),
        grid_spec=pltpu.PrefetchScalarGridSpec(
            num_scalar_prefetch=0,
            grid=(num_shards, inner_blocks),
            in_specs=[in_spec, in_spec],
            out_specs=out_spec,
            scratch_shapes=[
                pltpu.VMEM((acc_rows, cols), jnp.float32),  # sum(p*t) partial
                pltpu.VMEM((acc_rows, cols), jnp.float32),  # sum(p)   partial
                pltpu.VMEM((acc_rows, cols), jnp.float32),  # sum(t)   partial
            ],
        ),
        compiler_params=pltpu.CompilerParams(
            dimension_semantics=dim_sems,
            vmem_limit_bytes=VMEM_LIMIT_BYTES),
        cost_estimate=pl.CostEstimate(
            flops=5 * rows * cols, transcendentals=0,
            bytes_accessed=int(bytes_in)),
    )(p2d, t2d)

    # Tiny fused epilogue: cross-lane reduce of the partial tiles + dice.
    sums = jnp.sum(partials, axis=(0, 2, 3))
    inter, psum, tsum = sums[0], sums[1], sums[2]
    smooth = jnp.float32(smooth)
    dice = (2.0 * inter + smooth) / (psum + tsum + smooth)
    return 1.0 - dice


def dice_loss_ref(pred, target, smooth=1.0):
    p = jnp.ravel(pred).astype(jnp.float32)
    t = jnp.ravel(target).astype(jnp.float32)
    inter = jnp.sum(p * t)
    dice = (2.0 * inter + smooth) / (jnp.sum(p) + jnp.sum(t) + smooth)
    return 1.0 - dice


if __name__ == "__main__":
    key = jax.random.PRNGKey(0)
    k1, k2, k3, k4, k5, k6 = jax.random.split(key, 6)

    # Case 1: small NCHW-like segmentation head (lane-aligned (16,128) view).
    shape1 = (2, 4, 16, 16)
    pred1 = jax.nn.sigmoid(jax.random.normal(k1, shape1, dtype=jnp.float32))
    targ1 = (jax.random.uniform(k2, shape1) > 0.5).astype(jnp.float32)
    out1 = jax.block_until_ready(dice_loss(pred1, targ1, smooth=1.0))
    ref1 = jax.block_until_ready(dice_loss_ref(pred1, targ1, smooth=1.0))
    assert jnp.allclose(out1, ref1, atol=1e-5, rtol=1e-5), (out1, ref1)

    # Case 2: ragged numel (2*4*270*270 not a multiple of 128) -> zero-copy
    # (2160, 270) view, no wrapper-side padding; multi-block + edge mask.
    shape2 = (2, 4, 270, 270)
    pred2 = jax.nn.sigmoid(jax.random.normal(k3, shape2, dtype=jnp.float32))
    targ2 = (jax.random.uniform(k4, shape2) > 0.5).astype(jnp.float32)
    out2 = jax.block_until_ready(dice_loss(pred2, targ2, smooth=1.0))
    ref2 = jax.block_until_ready(dice_loss_ref(pred2, targ2, smooth=1.0))
    assert jnp.allclose(out2, ref2, atol=1e-4, rtol=1e-4), (out2, ref2)

    # Case 3: bf16 inputs stream in native dtype and are cast to f32 in-kernel.
    pred3 = pred1.astype(jnp.bfloat16)
    targ3 = targ1.astype(jnp.bfloat16)
    out3 = jax.block_until_ready(dice_loss(pred3, targ3, smooth=1.0))
    ref3 = jax.block_until_ready(dice_loss_ref(pred3, targ3, smooth=1.0))
    assert jnp.allclose(out3, ref3, atol=2e-3, rtol=2e-3), (out3, ref3)

    # Case 4: larger lane-aligned input exercising multiple grid steps, the
    # resident accumulators, and the gated ragged-row mask on the last block.
    shape4 = (2, 8, 300, 300)
    pred4 = jax.nn.sigmoid(jax.random.normal(k5, shape4, dtype=jnp.float32))
    targ4 = (jax.random.uniform(k6, shape4) > 0.5).astype(jnp.float32)
    out4 = jax.block_until_ready(dice_loss(pred4, targ4, smooth=1.0))
    ref4 = jax.block_until_ready(dice_loss_ref(pred4, targ4, smooth=1.0))
    assert jnp.allclose(out4, ref4, atol=1e-4, rtol=1e-4), (out4, ref4)

    print("KERNEL_OK")
</pallas_src>

<mosaic_0001>
module attributes {stable_mosaic.version = 11 : i64} {
  func.func @_dice_partial_kernel(%arg0: i32, %arg1: i32, %arg2: memref<16x128xf32, #tpu.memory_space<vmem>>, %arg3: memref<16x128xf32, #tpu.memory_space<vmem>>, %arg4: memref<1x3x8x128xf32, #tpu.memory_space<vmem>>, %arg5: memref<8x128xf32, #tpu.memory_space<vmem>>, %arg6: memref<8x128xf32, #tpu.memory_space<vmem>>, %arg7: memref<8x128xf32, #tpu.memory_space<vmem>>) attributes {dimension_semantics = [#tpu.dimension_semantics<arbitrary>, #tpu.dimension_semantics<arbitrary>], iteration_bounds = array<i64: 1, 1>, scalar_prefetch = 0 : i64, scratch_operands = 3 : i64, tpu.core_type = #tpu.core_type<tc>, window_params = [{transform_indices = @transform_0, window_bounds = array<i64: 16, 128>}, {transform_indices = @transform_1, window_bounds = array<i64: 16, 128>}, {transform_indices = @transform_2, window_bounds = array<i64: 1, 3, 8, 128>}]} {
    %c0_i32 = arith.constant 0 : i32
    %0 = arith.cmpi eq, %arg1, %c0_i32 : i32
    %1 = arith.extui %0 : i1 to i32
    %c0_i32_0 = arith.constant 0 : i32
    %2 = arith.cmpi ne, %1, %c0_i32_0 : i32
    scf.if %2 {
      %cst_20 = arith.constant 0.000000e+00 : f32
      %24 = vector.broadcast %cst_20 : f32 to vector<8x128xf32>
      %c0_21 = arith.constant 0 : index
      %c0_22 = arith.constant 0 : index
      %25 = vector.load %arg5[%c0_21, %c0_22] : memref<8x128xf32, #tpu.memory_space<vmem>>, vector<8x128xf32>
      tpu.vector_store %arg5[%c0_21, %c0_22], %24 {strides = array<i32>} : memref<8x128xf32, #tpu.memory_space<vmem>>, vector<8x128xf32>,
      %cst_23 = arith.constant 0.000000e+00 : f32
      %26 = vector.broadcast %cst_23 : f32 to vector<8x128xf32>
      %c0_24 = arith.constant 0 : index
      %c0_25 = arith.constant 0 : index
      %27 = vector.load %arg6[%c0_24, %c0_25] : memref<8x128xf32, #tpu.memory_space<vmem>>, vector<8x128xf32>
      tpu.vector_store %arg6[%c0_24, %c0_25], %26 {strides = array<i32>} : memref<8x128xf32, #tpu.memory_space<vmem>>, vector<8x128xf32>,
      %cst_26 = arith.constant 0.000000e+00 : f32
      %28 = vector.broadcast %cst_26 : f32 to vector<8x128xf32>
      %c0_27 = arith.constant 0 : index
      %c0_28 = arith.constant 0 : index
      %29 = vector.load %arg7[%c0_27, %c0_28] : memref<8x128xf32, #tpu.memory_space<vmem>>, vector<8x128xf32>
      tpu.vector_store %arg7[%c0_27, %c0_28], %28 {strides = array<i32>} : memref<8x128xf32, #tpu.memory_space<vmem>>, vector<8x128xf32>,
    } else {
    }
    %c0 = arith.constant 0 : index
    %c0_1 = arith.constant 0 : index
    %3 = vector.load %arg2[%c0, %c0_1] : memref<16x128xf32, #tpu.memory_space<vmem>>, vector<16x128xf32>
    %c0_2 = arith.constant 0 : index
    %c0_3 = arith.constant 0 : index
    %4 = vector.load %arg3[%c0_2, %c0_3] : memref<16x128xf32, #tpu.memory_space<vmem>>, vector<16x128xf32>
    %c0_4 = arith.constant 0 : index
    %c0_5 = arith.constant 0 : index
    %5 = vector.load %arg5[%c0_4, %c0_5] : memref<8x128xf32, #tpu.memory_space<vmem>>, vector<8x128xf32>
    %6 = arith.mulf %3, %4 : vector<16x128xf32>
    %7 = vector.shape_cast %6 : vector<16x128xf32> to vector<2x8x128xf32>
    %cst = arith.constant dense<0.000000e+00> : vector<8x128xf32>
    %8 = vector.multi_reduction <add>, %7, %cst [0] : vector<2x8x128xf32> to vector<8x128xf32>
    %9 = arith.addf %5, %8 : vector<8x128xf32>
    %c0_6 = arith.constant 0 : index
    %c0_7 = arith.constant 0 : index
    %10 = vector.load %arg5[%c0_6, %c0_7] : memref<8x128xf32, #tpu.memory_space<vmem>>, vector<8x128xf32>
    tpu.vector_store %arg5[%c0_6, %c0_7], %9 {strides = array<i32>} : memref<8x128xf32, #tpu.memory_space<vmem>>, vector<8x128xf32>,
    %c0_8 = arith.constant 0 : index
    %c0_9 = arith.constant 0 : index
    %11 = vector.load %arg6[%c0_8, %c0_9] : memref<8x128xf32, #tpu.memory_space<vmem>>, vector<8x128xf32>
    %12 = vector.shape_cast %3 : vector<16x128xf32> to vector<2x8x128xf32>
    %cst_10 = arith.constant dense<0.000000e+00> : vector<8x128xf32>
    %13 = vector.multi_reduction <add>, %12, %cst_10 [0] : vector<2x8x128xf32> to vector<8x128xf32>
    %14 = arith.addf %11, %13 : vector<8x128xf32>
    %c0_11 = arith.constant 0 : index
    %c0_12 = arith.constant 0 : index
    %15 = vector.load %arg6[%c0_11, %c0_12] : memref<8x128xf32, #tpu.memory_space<vmem>>, vector<8x128xf32>
    tpu.vector_store %arg6[%c0_11, %c0_12], %14 {strides = array<i32>} : memref<8x128xf32, #tpu.memory_space<vmem>>, vector<8x128xf32>,
    %c0_13 = arith.constant 0 : index
    %c0_14 = arith.constant 0 : index
    %16 = vector.load %arg7[%c0_13, %c0_14] : memref<8x128xf32, #tpu.memory_space<vmem>>, vector<8x128xf32>
    %17 = vector.shape_cast %4 : vector<16x128xf32> to vector<2x8x128xf32>
    %cst_15 = arith.constant dense<0.000000e+00> : vector<8x128xf32>
    %18 = vector.multi_reduction <add>, %17, %cst_15 [0] : vector<2x8x128xf32> to vector<8x128xf32>
    %19 = arith.addf %16, %18 : vector<8x128xf32>
    %c0_16 = arith.constant 0 : index
    %c0_17 = arith.constant 0 : index
    %20 = vector.load %arg7[%c0_16, %c0_17] : memref<8x128xf32, #tpu.memory_space<vmem>>, vector<8x128xf32>
    tpu.vector_store %arg7[%c0_16, %c0_17], %19 {strides = array<i32>} : memref<8x128xf32, #tpu.memory_space<vmem>>, vector<8x128xf32>,
    %c0_i32_18 = arith.constant 0 : i32
    %21 = arith.cmpi eq, %arg1, %c0_i32_18 : i32
    %22 = arith.extui %21 : i1 to i32
    %c0_i32_19 = arith.constant 0 : i32
    %23 = arith.cmpi ne, %22, %c0_i32_19 : i32
    scf.if %23 {
      %c0_20 = arith.constant 0 : index
      %c0_21 = arith.constant 0 : index
      %24 = vector.load %arg5[%c0_20, %c0_21] : memref<8x128xf32, #tpu.memory_space<vmem>>, vector<8x128xf32>
      %c0_22 = arith.constant 0 : index
      %c0_23 = arith.constant 0 : index
      %c0_24 = arith.constant 0 : index
      %c0_25 = arith.constant 0 : index
      %25 = vector.load %arg4[%c0_22, %c0_23, %c0_24, %c0_25] : memref<1x3x8x128xf32, #tpu.memory_space<vmem>>, vector<1x1x8x128xf32>
      %26 = vector.shape_cast %25 : vector<1x1x8x128xf32> to vector<8x128xf32>
      %27 = vector.shape_cast %24 : vector<8x128xf32> to vector<1x1x8x128xf32>
      tpu.vector_store %arg4[%c0_22, %c0_23, %c0_24, %c0_25], %27 {strides = array<i32>} : memref<1x3x8x128xf32, #tpu.memory_space<vmem>>, vector<1x1x8x128xf32>,
      %c0_26 = arith.constant 0 : index
      %c0_27 = arith.constant 0 : index
      %28 = vector.load %arg6[%c0_26, %c0_27] : memref<8x128xf32, #tpu.memory_space<vmem>>, vector<8x128xf32>
      %c0_28 = arith.constant 0 : index
      %c1 = arith.constant 1 : index
      %c0_29 = arith.constant 0 : index
      %c0_30 = arith.constant 0 : index
      %29 = vector.load %arg4[%c0_28, %c1, %c0_29, %c0_30] : memref<1x3x8x128xf32, #tpu.memory_space<vmem>>, vector<1x1x8x128xf32>
      %30 = vector.shape_cast %29 : vector<1x1x8x128xf32> to vector<8x128xf32>
      %31 = vector.shape_cast %28 : vector<8x128xf32> to vector<1x1x8x128xf32>
      tpu.vector_store %arg4[%c0_28, %c1, %c0_29, %c0_30], %31 {strides = array<i32>} : memref<1x3x8x128xf32, #tpu.memory_space<vmem>>, vector<1x1x8x128xf32>,
      %c0_31 = arith.constant 0 : index
      %c0_32 = arith.constant 0 : index
      %32 = vector.load %arg7[%c0_31, %c0_32] : memref<8x128xf32, #tpu.memory_space<vmem>>, vector<8x128xf32>
      %c0_33 = arith.constant 0 : index
      %c2 = arith.constant 2 : index
      %c0_34 = arith.constant 0 : index
      %c0_35 = arith.constant 0 : index
      %33 = vector.load %arg4[%c0_33, %c2, %c0_34, %c0_35] : memref<1x3x8x128xf32, #tpu.memory_space<vmem>>, vector<1x1x8x128xf32>
      %34 = vector.shape_cast %33 : vector<1x1x8x128xf32> to vector<8x128xf32>
      %35 = vector.shape_cast %32 : vector<8x128xf32> to vector<1x1x8x128xf32>
      tpu.vector_store %arg4[%c0_33, %c2, %c0_34, %c0_35], %35 {strides = array<i32>} : memref<1x3x8x128xf32, #tpu.memory_space<vmem>>, vector<1x1x8x128xf32>,
    } else {
    }
    return
  }
  func.func @transform_0(%arg0: i32, %arg1: i32) -> (i32, i32) {
    %c1_i32 = arith.constant 1 : i32
    %0 = arith.muli %arg0, %c1_i32 : i32
    %1 = arith.addi %0, %arg1 : i32
    %c0_i32 = arith.constant 0 : i32
    %c0_i32_0 = arith.constant 0 : i32
    return %1, %c0_i32 : i32, i32
  }
  func.func @transform_1(%arg0: i32, %arg1: i32) -> (i32, i32) {
    %c1_i32 = arith.constant 1 : i32
    %0 = arith.muli %arg0, %c1_i32 : i32
    %1 = arith.addi %0, %arg1 : i32
    %c0_i32 = arith.constant 0 : i32
    %c0_i32_0 = arith.constant 0 : i32
    return %1, %c0_i32 : i32, i32
  }
  func.func @transform_2(%arg0: i32, %arg1: i32) -> (i32, i32, i32, i32) {
    %c0_i32 = arith.constant 0 : i32
    %c0_i32_0 = arith.constant 0 : i32
    %c0_i32_1 = arith.constant 0 : i32
    %c0_i32_2 = arith.constant 0 : i32
    return %arg0, %c0_i32, %c0_i32_0, %c0_i32_1 : i32, i32, i32, i32
  }
}

</mosaic_0001>

<llo_original>
// kernel: tpu_custom_call.1
$region0: #{tpu_custom_call.1}
  #allocation0 [shape = 'u32[]', space=smem, size = 0x4, offset = 0x4, fixed_abs, tag = 'smem constant byte address 0x4 - core index']
  #allocation1 [shape = 'u32[144,128]{1,0:T(1,128)}', space=vmem, size = 0x12000, scoped, tag = 'internal scratch']
  #allocation2 [shape = 'f32[8,128]{1,0:T(8,128)}', space=vmem, size = 0x1000, scoped, tag = 'scratch operand']
  #allocation3 [shape = 'f32[8,128]{1,0:T(8,128)}', space=vmem, size = 0x1000, scoped, tag = 'scratch operand']
  #allocation4 [shape = 'f32[8,128]{1,0:T(8,128)}', space=vmem, size = 0x1000, scoped, tag = 'scratch operand']
  %s0 = inlined_call_operand.hbm [shape: f32[16,128], index: 0, kind: input, shape index: {}]
  %s1 = inlined_call_operand.hbm [shape: f32[16,128], index: 1, kind: input, shape index: {}]
  %s2 = inlined_call_operand.hbm [shape: f32[1,3,8,128], index: 2, kind: output, shape index: {}]
  %s3 = sld [smem:[#allocation0]]
  $region34: #{tpu_custom_call.1} parent=0
    _
  %s5 = ssub.s32 1, %s3
  %s6 = scalar_select 0, %s5, %s3
  $region1: #{tpu_custom_call.1} parent=0
    #allocation5 [shape = 'u8[8192]{0}', space=vmem, size = 0x2000, scoped, tag = 'input window, operand 0, single buffered']
    #allocation6 [shape = 's32[1]{0}', space=sflag, size = 0x4, scoped, tag = 'scoped memory for tpu_custom_call.1']
    #allocation7 [shape = 's32[1]{0}', space=sflag, size = 0x4, scoped, tag = 'scoped memory for tpu_custom_call.1']
    #allocation8 [shape = 'u8[8192]{0}', space=vmem, size = 0x2000, scoped, tag = 'input window, operand 1, single buffered']
    #allocation9 [shape = 's32[1]{0}', space=sflag, size = 0x4, scoped, tag = 'scoped memory for tpu_custom_call.1']
    #allocation10 [shape = 'u8[12288]{0}', space=vmem, size = 0x3000, scoped, tag = 'output window, operand 0, single buffered']
    %7 = vsyncpa [#allocation6], 0
    %8 = vsyncpa [#allocation9], 0
    %9 = vsyncpa [#allocation7], 0
    // Predicated region
    $region2: #{tpu_custom_call.1} parent=1 // pred_check
      _
    $region3: #{tpu_custom_call.1} parent=1 // pred_check_branch
      %11 = sbr.rel (0) target = $region5
    $region4: #{tpu_custom_call.1} parent=1 // pred_region
      %s12 = sadd.s32 0, 0
      %s13 = smul.u32 2, %s12
      %s15 = ssub.s32 256, 256
      %16 = vsyncadd [#allocation6], %s15
      %s17 = smul.addr %s13, 128
      %s18 = scalar_lea.hbm %s0, %s17
      %s19 = sshll.u32 [#allocation5], 4
      %s20 = int_to_ptr.vmem [resolvable:$true] %s19
      %25 = dma.hbm_to_vmem [thread:$0]  %s18, 256, %s20, [#allocation6], 128, 128, 8
    $region5: #{tpu_custom_call.1} parent=1 // pred_fallthru
      _
    // Predicated region
    $region6: #{tpu_custom_call.1} parent=1 // pred_check
      _
    $region7: #{tpu_custom_call.1} parent=1 // pred_check_branch
      %27 = sbr.rel (0) target = $region9
    $region8: #{tpu_custom_call.1} parent=1 // pred_region
      %s28 = sadd.s32 0, 0
      %s29 = smul.u32 2, %s28
      %s31 = ssub.s32 256, 256
      %32 = vsyncadd [#allocation9], %s31
      %s33 = smul.addr %s29, 128
      %s34 = scalar_lea.hbm %s1, %s33
      %s35 = sshll.u32 [#allocation8], 4
      %s36 = int_to_ptr.vmem [resolvable:$true] %s35
      %41 = dma.hbm_to_vmem [thread:$0]  %s34, 256, %s36, [#allocation9], 128, 128, 8
    $region9: #{tpu_custom_call.1} parent=1 // pred_fallthru
      _
    // Predicated region
    $region10: #{tpu_custom_call.1} parent=1 // pred_check
      _
    $region11: #{tpu_custom_call.1} parent=1 // pred_check_branch
      %43 = sbr.rel (0) target = $region13
    $region12: #{tpu_custom_call.1} parent=1 // pred_region
      %44 = dma.done [#allocation6], 256
    $region13: #{tpu_custom_call.1} parent=1 // pred_fallthru
      _
    // Predicated region
    $region14: #{tpu_custom_call.1} parent=1 // pred_check
      _
    $region15: #{tpu_custom_call.1} parent=1 // pred_check_branch
      %46 = sbr.rel (0) target = $region17
    $region16: #{tpu_custom_call.1} parent=1 // pred_region
      %47 = dma.done [#allocation9], 256
    $region17: #{tpu_custom_call.1} parent=1 // pred_fallthru
      _
    %s48 = sadd.s32 0, 0
    %s49 = smul.u32 2, %s48
    %s50 = sadd.s32 0, 0
    %s51 = smul.u32 2, %s50
    %p52 = scmp.eq.s32.totalorder 0, 0
    // Predicated region
    $region18: #{tpu_custom_call.1} parent=1 // pred_check
      %p53 = pneg %p52
    $region19: #{tpu_custom_call.1} parent=1 // pred_check_branch
      %55 = sbr.rel (%p53) target = $region21
    $region20: #{tpu_custom_call.1} parent=1 // pred_region
      %56 = vst [vmem:[#allocation2] sm:$0xff] 0.0
      %57 = vst [vmem:[#allocation3] sm:$0xff] 0.0
      %58 = vst [vmem:[#allocation4] sm:$0xff] 0.0
    $region21: #{tpu_custom_call.1} parent=1 // pred_fallthru
      _
    %v59 = vld [vmem:[#allocation5] sm:$0xff]
    %v60 = vld [vmem:[#allocation5 + $0x8] sm:$0xff]
    %v61 = vld [vmem:[#allocation8] sm:$0xff]
    %v62 = vld [vmem:[#allocation8 + $0x8] sm:$0xff]
    %v63 = vld [vmem:[#allocation2] sm:$0xff]
    %v64 = vmul.f32 %v59, %v61
    %v65 = vmul.f32 %v60, %v62
    %v66 = vadd.f32 %v64, %v65
    %v67 = vadd.f32 %v63, %v66
    %68 = vst [vmem:[#allocation2] sm:$0xff] %v67
    %v69 = vld [vmem:[#allocation3] sm:$0xff]
    %v70 = vadd.f32 %v59, %v60
    %v71 = vadd.f32 %v69, %v70
    %72 = vst [vmem:[#allocation3] sm:$0xff] %v71
    %v73 = vld [vmem:[#allocation4] sm:$0xff]
    %v74 = vadd.f32 %v61, %v62
    %v75 = vadd.f32 %v73, %v74
    %76 = vst [vmem:[#allocation4] sm:$0xff] %v75
    // Predicated region
    $region22: #{tpu_custom_call.1} parent=1 // pred_check
      %p77 = pneg %p52
    $region23: #{tpu_custom_call.1} parent=1 // pred_check_branch
      %79 = sbr.rel (%p77) target = $region25
    $region24: #{tpu_custom_call.1} parent=1 // pred_region
      %v80 = vld [vmem:[#allocation2] sm:$0xff]
      %81 = vst [vmem:[#allocation10] sm:$0xff] %v80
      %v82 = vld [vmem:[#allocation3] sm:$0xff]
      %s83 = scalar_lea.vmem [#allocation10], 8
      %84 = vst [vmem:[%s83] sm:$0xff] %v82
      %v85 = vld [vmem:[#allocation4] sm:$0xff]
      %s86 = scalar_lea.vmem [#allocation10], 16
      %87 = vst [vmem:[%s86] sm:$0xff] %v85
    $region25: #{tpu_custom_call.1} parent=1 // pred_fallthru
      _
    // Predicated region
    $region26: #{tpu_custom_call.1} parent=1 // pred_check
      _
    $region27: #{tpu_custom_call.1} parent=1 // pred_check_branch
      %89 = sbr.rel (0) target = $region29
    $region28: #{tpu_custom_call.1} parent=1 // pred_region
      %s91 = ssub.s32 384, 384
      %92 = vsyncadd [#allocation7], %s91
      %s93 = sshll.u32 [#allocation10], 4
      %s94 = int_to_ptr.vmem [resolvable:$true] %s93
      %99 = dma.vmem_to_hbm [thread:$0]  %s94, 384, %s2, [#allocation7], 128, 128, 8
    $region29: #{tpu_custom_call.1} parent=1 // pred_fallthru
      _
    // Predicated region
    $region30: #{tpu_custom_call.1} parent=1 // pred_check
      _
    $region31: #{tpu_custom_call.1} parent=1 // pred_check_branch
      %101 = sbr.rel (0) target = $region33
    $region32: #{tpu_custom_call.1} parent=1 // pred_region
      %102 = dma.done [#allocation7], 384
    $region33: #{tpu_custom_call.1} parent=1 // pred_fallthru
      _
    %103 = vsyncpa [#allocation6], 1
    %104 = vsyncpa [#allocation9], 1
    %105 = vsyncpa [#allocation7], 1

</llo_original>
